<compile_context>
chip_gen: v7x
topology: tpu7x:2x2x1
jax: 0.10.0
libtpu: 0.0.40
codegen_flags: <defaults>
</compile_context>

<pallas_src>
import functools
import math

import jax
import jax.numpy as jnp
from jax.experimental import pallas as pl
from jax.experimental.pallas import tpu as pltpu

LOG_STD_MIN = -20.0
LOG_STD_MAX = 2.0
_HALF_LOG_2PI = 0.5 * math.log(2.0 * math.pi)


def _round_up(x, m):
    return ((x + m - 1) // m) * m


def _bc_actor_kernel(*refs, n_trunk, obs_dim, act_dim, act_limit, deterministic):
    if deterministic:
        obs_ref, w_ref, b_ref, out_ref = refs
        eps_ref = None
    else:
        obs_ref, w_ref, b_ref, eps_ref, out_ref = refs

    tb, lane = out_ref.shape
    wdt = w_ref.dtype

    # ---- Trunk: Linear -> ReLU after every hidden layer (the reference mlp()
    # uses output_activation == activation, so ReLU follows the last one too).
    # Layer 0 contracts over the raw obs_dim (obs arrives unpadded); deeper
    # layers use the full (lane, lane) padded weight tile.  Padded lanes stay
    # exactly zero (zero weight rows/cols + zero bias padding), so the
    # 128-lane matmuls are exact.  All weight slices are Ref-side (free).
    x = obs_ref[...]                                            # (TB, obs_dim) f32
    h = jnp.dot(x.astype(wdt), w_ref[0, :obs_dim, :],
                preferred_element_type=jnp.float32)
    h = jnp.maximum(h + b_ref[0], 0.0)
    for j in range(1, n_trunk):
        h = jnp.dot(h.astype(wdt), w_ref[j], preferred_element_type=jnp.float32)
        h = jnp.maximum(h + b_ref[j], 0.0)

    # ---- Heads: two 128-lane-aligned matmuls; post-head math runs at full
    # lane width (EUP/VPU cost is per-vreg, not per-lane), so there are no
    # unaligned lane slices anywhere.
    hb = h.astype(wdt)
    mu_raw = jnp.dot(hb, w_ref[n_trunk],
                     preferred_element_type=jnp.float32) + b_ref[n_trunk]
    ls_raw = jnp.dot(hb, w_ref[n_trunk + 1],
                     preferred_element_type=jnp.float32) + b_ref[n_trunk + 1]

    mu = act_limit * jnp.tanh(mu_raw)
    # Affine map (NOT a clamp) -- matches the reference module exactly.
    log_std = LOG_STD_MIN + ls_raw * (LOG_STD_MAX - LOG_STD_MIN)

    if deterministic:
        pi = mu
        logp_elem = -log_std                                    # z == 0 exactly
    else:
        std = jnp.exp(log_std)
        pi = mu + std * eps_ref[...]
        # Keep torch's (pi - mu)/std form so logp stays numerically faithful to
        # Normal.log_prob even when std*eps underflows relative to mu.
        z = (pi - mu) / std
        logp_elem = -0.5 * (z * z) - log_std

    lane_ids = jax.lax.broadcasted_iota(jnp.int32, (tb, lane), 1)
    act_mask = lane_ids < act_dim
    logp = (jnp.sum(jnp.where(act_mask, logp_elem, 0.0), axis=-1, keepdims=True)
            - act_dim * _HALF_LOG_2PI)

    # One lane-dense, unmasked store: action in lanes [0:A], logp in lane A.
    out_ref[...] = jnp.where(act_mask, pi,
                             jnp.where(lane_ids == act_dim, logp, 0.0))


def pack_bc_actor_params(params, obs_dim, hidden_sizes, act_dim,
                         weight_dtype=jnp.bfloat16):
    """Pack weights into one zero-padded (L+2, lane, lane) slab (bf16 by
    default; rows a multiple of the bf16 (16,128) tile) plus a tiny separate
    f32 bias slab of shape (L+2, 1, lane).  Layers L and L+1 are the mu and
    log_std heads."""
    sizes = [obs_dim] + list(hidden_sizes)
    n_trunk = len(hidden_sizes)
    n_layers = n_trunk + 2
    lane = _round_up(max(max(sizes), act_dim), 128)

    layers = [(params[f"w{j + 1}"], params[f"b{j + 1}"]) for j in range(n_trunk)]
    layers.append((params["wmu"], params["bmu"]))
    layers.append((params["wls"], params["bls"]))

    w_slab = jnp.zeros((n_layers, lane, lane), jnp.float32)
    b_slab = jnp.zeros((n_layers, 1, lane), jnp.float32)
    for idx, (w, b) in enumerate(layers):
        w_slab = w_slab.at[idx, :w.shape[0], :w.shape[1]].set(w)
        b_slab = b_slab.at[idx, 0, :b.shape[-1]].set(b.reshape(-1))
    return w_slab.astype(weight_dtype), b_slab, lane


def bc_actor_forward(obs, w_slab, b_slab, act_dim, eps=None, *,
                     act_limit=1.0, deterministic=False, block_b=256):
    """Pallas implementation of BC_Actor.forward (with_logprob=True).

    Returns (pi_action (B, act_dim), logp_pi (B,)).
    """
    B, obs_dim = obs.shape
    n_layers, _, lane = w_slab.shape
    n_trunk = n_layers - 2
    assert n_trunk >= 1 and act_dim < lane

    # Batch tile: as large as block_b allows; multiple of 8 whenever it does
    # not cover the full batch (the (8,128) BlockSpec divisibility rule).
    tb = min(block_b, B)
    if tb < B:
        tb = max(8, (tb // 8) * 8)
    grid = (pl.cdiv(B, tb),)

    inputs = [obs.astype(jnp.float32), w_slab, b_slab]
    in_specs = [
        pl.BlockSpec((tb, obs_dim), lambda i: (i, 0)),      # obs tiles (pipelined)
        pl.BlockSpec(w_slab.shape, lambda i: (0, 0, 0)),    # weights: resident
        pl.BlockSpec(b_slab.shape, lambda i: (0, 0, 0)),    # biases: resident
    ]

    if not deterministic:
        assert eps is not None
        # Noise for rsample.  Accepts (B, act_dim) (torch semantics) or an
        # already lane-wide (B, lane) array; only lanes [0:act_dim] are used.
        # TODO(synk): optional in-kernel pltpu.prng_* noise to drop this DMA
        # (results would no longer match caller-supplied eps bit-for-bit).
        if eps.shape[-1] != lane:
            eps = jnp.zeros((B, lane), jnp.float32).at[:, :eps.shape[-1]].set(eps)
        inputs.append(eps.astype(jnp.float32))
        in_specs.append(pl.BlockSpec((tb, lane), lambda i: (i, 0)))

    kernel = functools.partial(
        _bc_actor_kernel, n_trunk=n_trunk, obs_dim=obs_dim, act_dim=act_dim,
        act_limit=float(act_limit), deterministic=deterministic)

    # Resident params + double-buffered obs/eps/out tiles, plus headroom.
    vmem_bytes = int(
        2 * w_slab.size * jnp.dtype(w_slab.dtype).itemsize
        + 2 * b_slab.size * 4
        + 2 * tb * obs_dim * 4
        + 4 * tb * lane * 4
        + (8 << 20))

    out = pl.pallas_call(
        kernel,
        out_shape=jax.ShapeDtypeStruct((B, lane), jnp.float32),
        grid=grid,
        in_specs=in_specs,
        out_specs=pl.BlockSpec((tb, lane), lambda i: (i, 0)),
        compiler_params=pltpu.CompilerParams(
            dimension_semantics=("parallel",),   # megacore batch split on v7x
            vmem_limit_bytes=vmem_bytes),
    )(*inputs)

    # NOTE (v5e): for huge rollout batches the (B,128) slab writeback dominates
    # HBM traffic; downstream consumers can read the slab directly instead of
    # slicing here (action = lanes [0:A], logp = lane A).
    return out[:, :act_dim], out[:, act_dim]


def init_params(key, obs_dim, hidden_sizes, act_dim):
    """Deterministic synthetic parameters (PyTorch-style uniform fan-in init)."""
    sizes = [obs_dim] + list(hidden_sizes)
    n_trunk = len(hidden_sizes)
    keys = jax.random.split(key, 2 * n_trunk + 4)
    params = {}

    def linear(kw, kb, fan_in, fan_out):
        bound = 1.0 / math.sqrt(fan_in)
        w = jax.random.uniform(kw, (fan_in, fan_out), jnp.float32, -bound, bound)
        b = jax.random.uniform(kb, (1, fan_out), jnp.float32, -bound, bound)
        return w, b

    ki = 0
    for j in range(n_trunk):
        params[f"w{j + 1}"], params[f"b{j + 1}"] = linear(
            keys[ki], keys[ki + 1], sizes[j], sizes[j + 1])
        ki += 2
    params["wmu"], params["bmu"] = linear(keys[ki], keys[ki + 1], sizes[-1], act_dim)
    params["wls"], params["bls"] = linear(keys[ki + 2], keys[ki + 3], sizes[-1], act_dim)
    # Center the log_std head like a trained policy: log_std = -20 + raw*22, so
    # raw ~ 0.8 puts std in a well-conditioned range instead of ~e^-20.
    params["wls"] = params["wls"] * 0.1
    params["bls"] = params["bls"] * 0.1 + 0.8
    return params


def _reference(obs, params, hidden_sizes, eps, act_limit, deterministic,
               weight_dtype=jnp.float32):
    """Pure-JAX mirror of the PyTorch BC_Actor.forward.  With
    weight_dtype=bfloat16 it mirrors the kernel's mixed-precision matmuls."""
    def mm(x, w):
        if weight_dtype == jnp.float32:
            return jnp.dot(x, w, precision=jax.lax.Precision.HIGHEST)
        return jnp.dot(x.astype(weight_dtype), w.astype(weight_dtype),
                       preferred_element_type=jnp.float32)

    h = obs
    for j in range(len(hidden_sizes)):
        h = jnp.maximum(mm(h, params[f"w{j + 1}"]) + params[f"b{j + 1}"], 0.0)
    mu = jnp.tanh(mm(h, params["wmu"]) + params["bmu"]) * act_limit
    raw = mm(h, params["wls"]) + params["bls"]
    log_std = LOG_STD_MIN + raw * (LOG_STD_MAX - LOG_STD_MIN)
    std = jnp.exp(log_std)
    pi = mu if deterministic else mu + std * eps
    logp = jnp.sum(-0.5 * ((pi - mu) / std) ** 2 - log_std - _HALF_LOG_2PI, axis=-1)
    return pi, logp


if __name__ == "__main__":
    B, OBS_DIM, ACT_DIM = 8, 16, 4
    HIDDEN = (32, 32)
    ACT_LIMIT = 1.0

    root = jax.random.PRNGKey(0)
    k_param, k_obs, k_eps = jax.random.split(root, 3)

    params = init_params(k_param, OBS_DIM, HIDDEN, ACT_DIM)
    obs = jax.random.normal(k_obs, (B, OBS_DIM), jnp.float32)
    eps = jax.random.normal(k_eps, (B, ACT_DIM), jnp.float32)

    w_slab, b_slab, lane = pack_bc_actor_params(params, OBS_DIM, HIDDEN, ACT_DIM)

    # Stochastic (rsample + logp) and deterministic (no eps DMA at all) paths.
    pi_s, logp_s = bc_actor_forward(obs, w_slab, b_slab, ACT_DIM, eps,
                                    act_limit=ACT_LIMIT, deterministic=False)
    pi_d, logp_d = bc_actor_forward(obs, w_slab, b_slab, ACT_DIM,
                                    act_limit=ACT_LIMIT, deterministic=True)
    jax.block_until_ready((pi_s, logp_s, pi_d, logp_d))

    assert pi_s.shape == (B, ACT_DIM) and logp_s.shape == (B,)

    # Tight check vs. a reference mirroring the kernel's bf16-weight numerics.
    rp, rl = _reference(obs, params, HIDDEN, eps, ACT_LIMIT, False, jnp.bfloat16)
    rpd, rld = _reference(obs, params, HIDDEN, eps, ACT_LIMIT, True, jnp.bfloat16)
    assert jnp.allclose(pi_s, rp, atol=2e-3, rtol=2e-3)
    assert jnp.allclose(logp_s, rl, atol=2e-2, rtol=2e-3)
    assert jnp.allclose(pi_d, rpd, atol=2e-3, rtol=2e-3)
    assert jnp.allclose(logp_d, rld, atol=2e-2, rtol=2e-3)

    # Loose sanity check vs. the full-f32 module (bf16 quantization bound).
    fp, fl = _reference(obs, params, HIDDEN, eps, ACT_LIMIT, False)
    fpd, fld = _reference(obs, params, HIDDEN, eps, ACT_LIMIT, True)
    assert jnp.allclose(pi_s, fp, atol=2e-2)
    assert jnp.allclose(logp_s, fl, atol=2.5e-1)
    assert jnp.allclose(pi_d, fpd, atol=2e-2)
    assert jnp.allclose(logp_d, fld, atol=2.5e-1)

    # Multi-tile batch grid (grid=(3,), params resident across the grid).
    B2 = 48
    k_obs2, k_eps2 = jax.random.split(jax.random.PRNGKey(1))
    obs2 = jax.random.normal(k_obs2, (B2, OBS_DIM), jnp.float32)
    eps2 = jax.random.normal(k_eps2, (B2, ACT_DIM), jnp.float32)
    pi2, logp2 = bc_actor_forward(obs2, w_slab, b_slab, ACT_DIM, eps2,
                                  act_limit=ACT_LIMIT, deterministic=False,
                                  block_b=16)
    jax.block_until_ready((pi2, logp2))
    rp2, rl2 = _reference(obs2, params, HIDDEN, eps2, ACT_LIMIT, False, jnp.bfloat16)
    assert jnp.allclose(pi2, rp2, atol=2e-3, rtol=2e-3)
    assert jnp.allclose(logp2, rl2, atol=2e-2, rtol=2e-3)

    print("KERNEL_OK")
</pallas_src>

<mosaic_0001>
module attributes {stable_mosaic.version = 11 : i64} {
  func.func @_bc_actor_kernel(%arg0: i32, %arg1: memref<8x16xf32, #tpu.memory_space<vmem>>, %arg2: memref<4x128x128xbf16, #tpu.memory_space<vmem>>, %arg3: memref<4x1x128xf32, #tpu.memory_space<vmem>>, %arg4: memref<8x128xf32, #tpu.memory_space<vmem>>, %arg5: memref<8x128xf32, #tpu.memory_space<vmem>>) attributes {dimension_semantics = [#tpu.dimension_semantics<parallel>], iteration_bounds = array<i64: 1>, scalar_prefetch = 0 : i64, scratch_operands = 0 : i64, tpu.core_type = #tpu.core_type<tc>, window_params = [{transform_indices = @transform_0, window_bounds = array<i64: 8, 16>}, {pipeline_mode = #tpu.pipeline_mode<synchronous>, transform_indices = @transform_1, window_bounds = array<i64: 4, 128, 128>}, {pipeline_mode = #tpu.pipeline_mode<synchronous>, transform_indices = @transform_2, window_bounds = array<i64: 4, 1, 128>}, {transform_indices = @transform_3, window_bounds = array<i64: 8, 128>}, {transform_indices = @transform_4, window_bounds = array<i64: 8, 128>}]} {
    %c0 = arith.constant 0 : index
    %c0_0 = arith.constant 0 : index
    %0 = vector.load %arg1[%c0, %c0_0] : memref<8x16xf32, #tpu.memory_space<vmem>>, vector<8x16xf32>
    %1 = arith.truncf %0 : vector<8x16xf32> to vector<8x16xbf16>
    %c0_1 = arith.constant 0 : index
    %c0_2 = arith.constant 0 : index
    %c0_3 = arith.constant 0 : index
    %2 = vector.load %arg2[%c0_1, %c0_2, %c0_3] : memref<4x128x128xbf16, #tpu.memory_space<vmem>>, vector<1x16x128xbf16>
    %3 = vector.shape_cast %2 : vector<1x16x128xbf16> to vector<16x128xbf16>
    %cst = arith.constant dense<0.000000e+00> : vector<8x128xf32>
    %4 = tpu.matmul %1, %3, %cst {dimension_numbers = #tpu.dot_dimension_numbers<[1], [0], [0], [1], [0, 0, 1, 1], [], []>} : vector<8x16xbf16>, vector<16x128xbf16>, vector<8x128xf32> -> vector<8x128xf32>
    %c0_4 = arith.constant 0 : index
    %c0_5 = arith.constant 0 : index
    %c0_6 = arith.constant 0 : index
    %5 = vector.load %arg3[%c0_4, %c0_5, %c0_6] : memref<4x1x128xf32, #tpu.memory_space<vmem>>, vector<1x1x128xf32>
    %6 = vector.shape_cast %5 : vector<1x1x128xf32> to vector<1x128xf32>
    %7 = vector.broadcast %6 : vector<1x128xf32> to vector<8x128xf32>
    %8 = arith.addf %4, %7 : vector<8x128xf32>
    %cst_7 = arith.constant 0.000000e+00 : f32
    %9 = vector.broadcast %cst_7 : f32 to vector<8x128xf32>
    %10 = arith.maximumf %8, %9 : vector<8x128xf32>
    %11 = arith.truncf %10 : vector<8x128xf32> to vector<8x128xbf16>
    %c1 = arith.constant 1 : index
    %c0_8 = arith.constant 0 : index
    %c0_9 = arith.constant 0 : index
    %12 = vector.load %arg2[%c1, %c0_8, %c0_9] : memref<4x128x128xbf16, #tpu.memory_space<vmem>>, vector<1x128x128xbf16>
    %13 = vector.shape_cast %12 : vector<1x128x128xbf16> to vector<128x128xbf16>
    %cst_10 = arith.constant dense<0.000000e+00> : vector<8x128xf32>
    %14 = tpu.matmul %11, %13, %cst_10 {dimension_numbers = #tpu.dot_dimension_numbers<[1], [0], [0], [1], [0, 0, 1, 1], [], []>} : vector<8x128xbf16>, vector<128x128xbf16>, vector<8x128xf32> -> vector<8x128xf32>
    %c1_11 = arith.constant 1 : index
    %c0_12 = arith.constant 0 : index
    %c0_13 = arith.constant 0 : index
    %15 = vector.load %arg3[%c1_11, %c0_12, %c0_13] : memref<4x1x128xf32, #tpu.memory_space<vmem>>, vector<1x1x128xf32>
    %16 = vector.shape_cast %15 : vector<1x1x128xf32> to vector<1x128xf32>
    %17 = vector.broadcast %16 : vector<1x128xf32> to vector<8x128xf32>
    %18 = arith.addf %14, %17 : vector<8x128xf32>
    %cst_14 = arith.constant 0.000000e+00 : f32
    %19 = vector.broadcast %cst_14 : f32 to vector<8x128xf32>
    %20 = arith.maximumf %18, %19 : vector<8x128xf32>
    %21 = arith.truncf %20 : vector<8x128xf32> to vector<8x128xbf16>
    %c2 = arith.constant 2 : index
    %c0_15 = arith.constant 0 : index
    %c0_16 = arith.constant 0 : index
    %22 = vector.load %arg2[%c2, %c0_15, %c0_16] : memref<4x128x128xbf16, #tpu.memory_space<vmem>>, vector<1x128x128xbf16>
    %23 = vector.shape_cast %22 : vector<1x128x128xbf16> to vector<128x128xbf16>
    %cst_17 = arith.constant dense<0.000000e+00> : vector<8x128xf32>
    %24 = tpu.matmul %21, %23, %cst_17 {dimension_numbers = #tpu.dot_dimension_numbers<[1], [0], [0], [1], [0, 0, 1, 1], [], []>} : vector<8x128xbf16>, vector<128x128xbf16>, vector<8x128xf32> -> vector<8x128xf32>
    %c2_18 = arith.constant 2 : index
    %c0_19 = arith.constant 0 : index
    %c0_20 = arith.constant 0 : index
    %25 = vector.load %arg3[%c2_18, %c0_19, %c0_20] : memref<4x1x128xf32, #tpu.memory_space<vmem>>, vector<1x1x128xf32>
    %26 = vector.shape_cast %25 : vector<1x1x128xf32> to vector<1x128xf32>
    %27 = vector.broadcast %26 : vector<1x128xf32> to vector<8x128xf32>
    %28 = arith.addf %24, %27 : vector<8x128xf32>
    %c3 = arith.constant 3 : index
    %c0_21 = arith.constant 0 : index
    %c0_22 = arith.constant 0 : index
    %29 = vector.load %arg2[%c3, %c0_21, %c0_22] : memref<4x128x128xbf16, #tpu.memory_space<vmem>>, vector<1x128x128xbf16>
    %30 = vector.shape_cast %29 : vector<1x128x128xbf16> to vector<128x128xbf16>
    %cst_23 = arith.constant dense<0.000000e+00> : vector<8x128xf32>
    %31 = tpu.matmul %21, %30, %cst_23 {dimension_numbers = #tpu.dot_dimension_numbers<[1], [0], [0], [1], [0, 0, 1, 1], [], []>} : vector<8x128xbf16>, vector<128x128xbf16>, vector<8x128xf32> -> vector<8x128xf32>
    %c3_24 = arith.constant 3 : index
    %c0_25 = arith.constant 0 : index
    %c0_26 = arith.constant 0 : index
    %32 = vector.load %arg3[%c3_24, %c0_25, %c0_26] : memref<4x1x128xf32, #tpu.memory_space<vmem>>, vector<1x1x128xf32>
    %33 = vector.shape_cast %32 : vector<1x1x128xf32> to vector<1x128xf32>
    %34 = vector.broadcast %33 : vector<1x128xf32> to vector<8x128xf32>
    %35 = arith.addf %31, %34 : vector<8x128xf32>
    %36 = math.tanh %28 : vector<8x128xf32>
    %cst_27 = arith.constant 1.000000e+00 : f32
    %37 = vector.broadcast %cst_27 : f32 to vector<8x128xf32>
    %38 = arith.mulf %37, %36 : vector<8x128xf32>
    %cst_28 = arith.constant 2.200000e+01 : f32
    %39 = vector.broadcast %cst_28 : f32 to vector<8x128xf32>
    %40 = arith.mulf %35, %39 : vector<8x128xf32>
    %cst_29 = arith.constant -2.000000e+01 : f32
    %41 = vector.broadcast %cst_29 : f32 to vector<8x128xf32>
    %42 = arith.addf %41, %40 : vector<8x128xf32>
    %43 = math.exp %42 : vector<8x128xf32>
    %c0_30 = arith.constant 0 : index
    %c0_31 = arith.constant 0 : index
    %44 = vector.load %arg4[%c0_30, %c0_31] : memref<8x128xf32, #tpu.memory_space<vmem>>, vector<8x128xf32>
    %45 = arith.mulf %43, %44 : vector<8x128xf32>
    %46 = arith.addf %38, %45 : vector<8x128xf32>
    %47 = arith.subf %46, %38 : vector<8x128xf32>
    %48 = arith.divf %47, %43 : vector<8x128xf32>
    %49 = arith.mulf %48, %48 : vector<8x128xf32>
    %cst_32 = arith.constant -5.000000e-01 : f32
    %50 = vector.broadcast %cst_32 : f32 to vector<8x128xf32>
    %51 = arith.mulf %50, %49 : vector<8x128xf32>
    %52 = arith.subf %51, %42 : vector<8x128xf32>
    %53 = tpu.iota {dimensions = array<i32: 1>} : vector<8x128xi32>
    %c4_i32 = arith.constant 4 : i32
    %54 = vector.broadcast %c4_i32 : i32 to vector<8x128xi32>
    %55 = arith.cmpi slt, %53, %54 : vector<8x128xi32>
    %cst_33 = arith.constant 0.000000e+00 : f32
    %56 = vector.broadcast %cst_33 : f32 to vector<8x128xf32>
    %57 = arith.select %55, %52, %56 : vector<8x128xi1>, vector<8x128xf32>
    %cst_34 = arith.constant dense<0.000000e+00> : vector<8xf32>
    %58 = vector.multi_reduction <add>, %57, %cst_34 [1] : vector<8x128xf32> to vector<8xf32>
    %59 = vector.shape_cast %58 : vector<8xf32> to vector<8x1xf32>
    %cst_35 = arith.constant 3.67575407 : f32
    %60 = vector.broadcast %cst_35 : f32 to vector<8x1xf32>
    %61 = arith.subf %59, %60 : vector<8x1xf32>
    %c4_i32_36 = arith.constant 4 : i32
    %62 = vector.broadcast %c4_i32_36 : i32 to vector<8x128xi32>
    %63 = arith.cmpi eq, %53, %62 : vector<8x128xi32>
    %cst_37 = arith.constant 0.000000e+00 : f32
    %64 = vector.shape_cast %61 : vector<8x1xf32> to vector<8x1xf32>
    %65 = vector.broadcast %64 : vector<8x1xf32> to vector<8x128xf32>
    %66 = vector.broadcast %cst_37 : f32 to vector<8x128xf32>
    %67 = arith.select %63, %65, %66 : vector<8x128xi1>, vector<8x128xf32>
    %68 = arith.select %55, %46, %67 : vector<8x128xi1>, vector<8x128xf32>
    %c0_38 = arith.constant 0 : index
    %c0_39 = arith.constant 0 : index
    %69 = vector.load %arg5[%c0_38, %c0_39] : memref<8x128xf32, #tpu.memory_space<vmem>>, vector<8x128xf32>
    tpu.vector_store %arg5[%c0_38, %c0_39], %68 {strides = array<i32>} : memref<8x128xf32, #tpu.memory_space<vmem>>, vector<8x128xf32>,
    return
  }
  func.func @transform_0(%arg0: i32) -> (i32, i32) {
    %c0_i32 = arith.constant 0 : i32
    %c0_i32_0 = arith.constant 0 : i32
    return %arg0, %c0_i32 : i32, i32
  }
  func.func @transform_1(%arg0: i32) -> (i32, i32, i32) {
    %c0_i32 = arith.constant 0 : i32
    %c0_i32_0 = arith.constant 0 : i32
    %c0_i32_1 = arith.constant 0 : i32
    %c0_i32_2 = arith.constant 0 : i32
    return %c0_i32, %c0_i32_0, %c0_i32_1 : i32, i32, i32
  }
  func.func @transform_2(%arg0: i32) -> (i32, i32, i32) {
    %c0_i32 = arith.constant 0 : i32
    %c0_i32_0 = arith.constant 0 : i32
    %c0_i32_1 = arith.constant 0 : i32
    %c0_i32_2 = arith.constant 0 : i32
    return %c0_i32, %c0_i32_0, %c0_i32_1 : i32, i32, i32
  }
  func.func @transform_3(%arg0: i32) -> (i32, i32) {
    %c0_i32 = arith.constant 0 : i32
    %c0_i32_0 = arith.constant 0 : i32
    return %arg0, %c0_i32 : i32, i32
  }
  func.func @transform_4(%arg0: i32) -> (i32, i32) {
    %c0_i32 = arith.constant 0 : i32
    %c0_i32_0 = arith.constant 0 : i32
    return %arg0, %c0_i32 : i32, i32
  }
}

</mosaic_0001>

<llo_original>
// kernel: tpu_custom_call.1
$region0: #{tpu_custom_call.1}
  #allocation0 [shape = 'u32[]', space=smem, size = 0x4, offset = 0x4, fixed_abs, tag = 'smem constant byte address 0x4 - core index']
  #allocation1 [shape = 'u32[144,128]{1,0:T(1,128)}', space=vmem, size = 0x12000, scoped, tag = 'internal scratch']
  %s0 = inlined_call_operand.hbm [shape: f32[8,16], index: 0, kind: input, shape index: {}]
  %s1 = inlined_call_operand.hbm [shape: bf16[4,128,128], index: 1, kind: input, shape index: {}]
  %s2 = inlined_call_operand.hbm [shape: f32[4,1,128], index: 2, kind: input, shape index: {}]
  %s3 = inlined_call_operand.vmem [shape: f32[8,128], index: 3, kind: input, shape index: {}]
  %s4 = inlined_call_operand.hbm [shape: f32[8,128], index: 4, kind: output, shape index: {}]
  %s5 = sld [smem:[#allocation0]]
  $region38: #{tpu_custom_call.1} parent=0
    _
  %s7 = ssub.s32 1, %s5
  %s8 = scalar_select 0, %s7, %s5
  $region1: #{tpu_custom_call.1} parent=0
    #allocation2 [shape = 'u8[4096]{0}', space=vmem, size = 0x1000, scoped, tag = 'input window, operand 0, single buffered']
    #allocation3 [shape = 's32[1]{0}', space=sflag, size = 0x4, scoped, tag = 'scoped memory for tpu_custom_call.1']
    #allocation4 [shape = 's32[1]{0}', space=sflag, size = 0x4, scoped, tag = 'scoped memory for tpu_custom_call.1']
    #allocation5 [shape = 'u8[131072]{0}', space=vmem, size = 0x20000, scoped, tag = 'input window, operand 1, single buffered']
    #allocation6 [shape = 's32[1]{0}', space=sflag, size = 0x4, scoped, tag = 'scoped memory for tpu_custom_call.1']
    #allocation7 [shape = 'u8[2048]{0}', space=vmem, size = 0x800, scoped, tag = 'input window, operand 2, single buffered']
    #allocation8 [shape = 'u8[4096]{0}', space=vmem, size = 0x1000, scoped, tag = 'output window, operand 0, single buffered']
    %9 = vsyncpa [#allocation3], 0
    %10 = vsyncpa [#allocation6], 0
    %11 = vsyncpa [#allocation4], 0
    // Predicated region
    $region2: #{tpu_custom_call.1} parent=1 // pred_check
      _
    $region3: #{tpu_custom_call.1} parent=1 // pred_check_branch
      %13 = sbr.rel (0) target = $region5
    $region4: #{tpu_custom_call.1} parent=1 // pred_region
      %s15 = ssub.s32 128, 128
      %16 = vsyncadd [#allocation3], %s15
      %s18 = sshll.u32 [#allocation2], 4
      %s19 = int_to_ptr.vmem [resolvable:$true] %s18
      %21 = dma.hbm_to_vmem [thread:$0]  %s0, 128, %s19, [#allocation3]
    $region5: #{tpu_custom_call.1} parent=1 // pred_fallthru
      _
    // Predicated region
    $region6: #{tpu_custom_call.1} parent=1 // pred_check
      _
    $region7: #{tpu_custom_call.1} parent=1 // pred_check_branch
      %23 = sbr.rel (0) target = $region9
    $region8: #{tpu_custom_call.1} parent=1 // pred_region
      %s25 = ssub.s32 4096, 4096
      %26 = vsyncadd [#allocation6], %s25
      %s27 = sshll.u32 [#allocation5], 4
      %s28 = int_to_ptr.vmem [resolvable:$true] %s27
      %33 = dma.hbm_to_vmem [thread:$0]  %s1, 4096, %s28, [#allocation6], 64, 64, 4
    $region9: #{tpu_custom_call.1} parent=1 // pred_fallthru
      _
    // Predicated region
    $region10: #{tpu_custom_call.1} parent=1 // pred_check
      _
    $region11: #{tpu_custom_call.1} parent=1 // pred_check_branch
      %35 = sbr.rel (0) target = $region13
    $region12: #{tpu_custom_call.1} parent=1 // pred_region
      %s37 = ssub.s32 64, 64
      %38 = vsyncadd [#allocation6], %s37
      %s39 = sshll.u32 [#allocation7], 4
      %s40 = int_to_ptr.vmem [resolvable:$true] %s39
      %45 = dma.hbm_to_vmem [thread:$0]  %s2, 64, %s40, [#allocation6], 16, 16, 1
    $region13: #{tpu_custom_call.1} parent=1 // pred_fallthru
      _
    // Predicated region
    $region14: #{tpu_custom_call.1} parent=1 // pred_check
      _
    $region15: #{tpu_custom_call.1} parent=1 // pred_check_branch
      %47 = sbr.rel (0) target = $region17
    $region16: #{tpu_custom_call.1} parent=1 // pred_region
      _
    $region17: #{tpu_custom_call.1} parent=1 // pred_fallthru
      _
    // Predicated region
    $region18: #{tpu_custom_call.1} parent=1 // pred_check
      _
    $region19: #{tpu_custom_call.1} parent=1 // pred_check_branch
      %49 = sbr.rel (0) target = $region21
    $region20: #{tpu_custom_call.1} parent=1 // pred_region
      %50 = dma.done [#allocation3], 128
    $region21: #{tpu_custom_call.1} parent=1 // pred_fallthru
      _
    // Predicated region
    $region22: #{tpu_custom_call.1} parent=1 // pred_check
      _
    $region23: #{tpu_custom_call.1} parent=1 // pred_check_branch
      %52 = sbr.rel (0) target = $region25
    $region24: #{tpu_custom_call.1} parent=1 // pred_region
      %53 = dma.done [#allocation6], 4096
    $region25: #{tpu_custom_call.1} parent=1 // pred_fallthru
      _
    // Predicated region
    $region26: #{tpu_custom_call.1} parent=1 // pred_check
      _
    $region27: #{tpu_custom_call.1} parent=1 // pred_check_branch
      %55 = sbr.rel (0) target = $region29
    $region28: #{tpu_custom_call.1} parent=1 // pred_region
      %56 = dma.done [#allocation6], 64
    $region29: #{tpu_custom_call.1} parent=1 // pred_fallthru
      _
    %v58 = vld [vmem:[#allocation2] sm:$0xff]
    %v59 = vpack.c.bf16 %v58, %v58
    %v60 = vld [vmem:[#allocation5] sm:$0xf]
    %v61 = vld [vmem:[#allocation5 + $0x4] sm:$0xf]
    %v62 = vld [vmem:[#allocation7] sm:$0x1]
    %v64 = vlaneseq
    %v65 = vshrl.u32 %v64, 7
    %v66 = vsub.s32 0, %v65
    %v67 = vrot.slane %v62, %v66
    %v71 = vunpack.c.l.b16 %v60
    %v72 = vunpack.c.l.b16 %v61
    %v73 = vpack.c.b16 %v72, %v71
    %vm75 = vcmask 130048
    %v77 = vsel %vm75, %v59, 0
    %79 = vmatprep.subr.bf16.mxu0 0
    %80 = vmatpush1.bf16.msra.mxu0 %v73
    %81 = vmatprep.subr.bf16.mxu0 0
    %82 = vmatpush1.bf16.msra.mxu0 0
    %83 = vmatprep.subr.bf16.mxu0 0
    %84 = vmatpush1.bf16.msra.mxu0 0
    %85 = vmatprep.subr.bf16.mxu0 0
    %86 = vmatpush1.bf16.msra.mxu0 0
    %87 = vmatprep.subr.bf16.mxu0 0
    %88 = vmatpush1.bf16.msra.mxu0 0
    %89 = vmatprep.subr.bf16.mxu0 0
    %90 = vmatpush1.bf16.msra.mxu0 0
    %91 = vmatprep.subr.bf16.mxu0 0
    %92 = vmatpush1.bf16.msra.mxu0 0
    %93 = vmatprep.subr.bf16.mxu0 0
    %94 = vmatpush1.bf16.msra.mxu0 0
    %95 = vmatprep.subr.bf16.mxu0 0
    %96 = vmatpush1.bf16.msra.mxu0 0
    %97 = vmatprep.subr.bf16.mxu0 0
    %98 = vmatpush1.bf16.msra.mxu0 0
    %99 = vmatprep.subr.bf16.mxu0 0
    %100 = vmatpush1.bf16.msra.mxu0 0
    %101 = vmatprep.subr.bf16.mxu0 0
    %102 = vmatpush1.bf16.msra.mxu0 0
    %103 = vmatprep.subr.bf16.mxu0 0
    %104 = vmatpush1.bf16.msra.mxu0 0
    %105 = vmatprep.subr.bf16.mxu0 0
    %106 = vmatpush1.bf16.msra.mxu0 0
    %107 = vmatprep.subr.bf16.mxu0 0
    %108 = vmatpush1.bf16.msra.mxu0 0
    %109 = vmatprep.subr.bf16.mxu0 0
    %110 = vmatpush1.bf16.msra.mxu0 0
    %111 = vmatprep.mubr.bf16.mxu0 0
    %112 = vmatmul.mubr.bf16.gmra.mrb[0].mxu0 %v77
    %v113 = vpop.f32.mrb[0].mxu0
    %v114 = vadd.f32 %v67, %v113
    %v115 = vpop.f32.mrb[0].mxu0
    %v116 = vpop.f32.mrb[0].mxu0
    %v117 = vpop.f32.mrb[0].mxu0
    %118 = vdwg.mxu0
    %v119 = vmax.f32 %v114, 0.0
    %v120 = vpack.c.bf16 %v119, %v119
    %s121 = scalar_lea.vmem [#allocation5], 64
    %v122 = vld [vmem:[%s121] sm:$0xf]
    %v123 = vld [vmem:[%s121 + $0x4] sm:$0xf]
    %v124 = vld [vmem:[%s121 + $0x8] sm:$0xf]
    %v125 = vld [vmem:[%s121 + $0xc] sm:$0xf]
    %v126 = vld [vmem:[%s121 + $0x10] sm:$0xf]
    %v127 = vld [vmem:[%s121 + $0x14] sm:$0xf]
    %v128 = vld [vmem:[%s121 + $0x18] sm:$0xf]
    %v129 = vld [vmem:[%s121 + $0x1c] sm:$0xf]
    %v130 = vld [vmem:[%s121 + $0x20] sm:$0xf]
    %v131 = vld [vmem:[%s121 + $0x24] sm:$0xf]
    %v132 = vld [vmem:[%s121 + $0x28] sm:$0xf]
    %v133 = vld [vmem:[%s121 + $0x2c] sm:$0xf]
    %v134 = vld [vmem:[%s121 + $0x30] sm:$0xf]
    %v135 = vld [vmem:[%s121 + $0x34] sm:$0xf]
    %v136 = vld [vmem:[%s121 + $0x38] sm:$0xf]
    %v137 = vld [vmem:[%s121 + $0x3c] sm:$0xf]
    %s138 = scalar_lea.vmem [#allocation7], 1
    %v139 = vld [vmem:[%s138] sm:$0x1]
    %v141 = vlaneseq
    %v142 = vshrl.u32 %v141, 7
    %v143 = vsub.s32 0, %v142
    %v144 = vrot.slane %v139, %v143
    %v162 = vunpack.c.l.b16 %v122
    %v163 = vunpack.c.l.b16 %v123
    %v164 = vunpack.c.l.b16 %v124
    %v165 = vunpack.c.l.b16 %v125
    %v166 = vunpack.c.l.b16 %v126
    %v167 = vunpack.c.l.b16 %v127
    %v168 = vunpack.c.l.b16 %v128
    %v169 = vunpack.c.l.b16 %v129
    %v170 = vunpack.c.l.b16 %v130
    %v171 = vunpack.c.l.b16 %v131
    %v172 = vunpack.c.l.b16 %v132
    %v173 = vunpack.c.l.b16 %v133
    %v174 = vunpack.c.l.b16 %v134
    %v175 = vunpack.c.l.b16 %v135
    %v176 = vunpack.c.l.b16 %v136
    %v177 = vunpack.c.l.b16 %v137
    %v178 = vpack.c.b16 %v163, %v162
    %v179 = vpack.c.b16 %v165, %v164
    %v180 = vpack.c.b16 %v167, %v166
    %v181 = vpack.c.b16 %v169, %v168
    %v182 = vpack.c.b16 %v171, %v170
    %v183 = vpack.c.b16 %v173, %v172
    %v184 = vpack.c.b16 %v175, %v174
    %v185 = vpack.c.b16 %v177, %v176
    %194 = vmatprep.subr.bf16.mxu0 0
    %195 = vmatpush1.bf16.msra.mxu0 %v178
    %196 = vmatprep.subr.bf16.mxu0 0
    %197 = vmatpush1.bf16.msra.mxu0 %v179
    %198 = vmatprep.subr.bf16.mxu0 0
    %199 = vmatpush1.bf16.msra.mxu0 %v180
    %200 = vmatprep.subr.bf16.mxu0 0
    %201 = vmatpush1.bf16.msra.mxu0 %v181
    %202 = vmatprep.subr.bf16.mxu0 0
    %203 = vmatpush1.bf16.msra.mxu0 %v182
    %204 = vmatprep.subr.bf16.mxu0 0
    %205 = vmatpush1.bf16.msra.mxu0 %v183
    %206 = vmatprep.subr.bf16.mxu0 0
    %207 = vmatpush1.bf16.msra.mxu0 %v184
    %208 = vmatprep.subr.bf16.mxu0 0
    %209 = vmatpush1.bf16.msra.mxu0 %v185
    %210 = vmatprep.subr.bf16.mxu0 0
    %211 = vmatpush1.bf16.msra.mxu0 0
    %212 = vmatprep.subr.bf16.mxu0 0
    %213 = vmatpush1.bf16.msra.mxu0 0
    %214 = vmatprep.subr.bf16.mxu0 0
    %215 = vmatpush1.bf16.msra.mxu0 0
    %216 = vmatprep.subr.bf16.mxu0 0
    %217 = vmatpush1.bf16.msra.mxu0 0
    %218 = vmatprep.subr.bf16.mxu0 0
    %219 = vmatpush1.bf16.msra.mxu0 0
    %220 = vmatprep.subr.bf16.mxu0 0
    %221 = vmatpush1.bf16.msra.mxu0 0
    %222 = vmatprep.subr.bf16.mxu0 0
    %223 = vmatpush1.bf16.msra.mxu0 0
    %224 = vmatprep.subr.bf16.mxu0 0
    %225 = vmatpush1.bf16.msra.mxu0 0
    %226 = vmatprep.mubr.bf16.mxu0 0
    %227 = vmatmul.mubr.bf16.gmra.mrb[0].mxu0 %v120
    %v228 = vpop.f32.mrb[0].mxu0
    %v229 = vadd.f32 %v144, %v228
    %v230 = vpop.f32.mrb[0].mxu0
    %v231 = vpop.f32.mrb[0].mxu0
    %v232 = vpop.f32.mrb[0].mxu0
    %233 = vdwg.mxu0
    %v234 = vmax.f32 %v229, 0.0
    %v235 = vpack.c.bf16 %v234, %v234
    %s236 = scalar_lea.vmem [#allocation5], 128
    %v237 = vld [vmem:[%s236] sm:$0xf]
    %v238 = vld [vmem:[%s236 + $0x4] sm:$0xf]
    %v239 = vld [vmem:[%s236 + $0x8] sm:$0xf]
    %v240 = vld [vmem:[%s236 + $0xc] sm:$0xf]
    %v241 = vld [vmem:[%s236 + $0x10] sm:$0xf]
    %v242 = vld [vmem:[%s236 + $0x14] sm:$0xf]
    %v243 = vld [vmem:[%s236 + $0x18] sm:$0xf]
    %v244 = vld [vmem:[%s236 + $0x1c] sm:$0xf]
    %v245 = vld [vmem:[%s236 + $0x20] sm:$0xf]
    %v246 = vld [vmem:[%s236 + $0x24] sm:$0xf]
    %v247 = vld [vmem:[%s236 + $0x28] sm:$0xf]
    %v248 = vld [vmem:[%s236 + $0x2c] sm:$0xf]
    %v249 = vld [vmem:[%s236 + $0x30] sm:$0xf]
    %v250 = vld [vmem:[%s236 + $0x34] sm:$0xf]
    %v251 = vld [vmem:[%s236 + $0x38] sm:$0xf]
    %v252 = vld [vmem:[%s236 + $0x3c] sm:$0xf]
    %s253 = scalar_lea.vmem [#allocation7], 2
    %v254 = vld [vmem:[%s253] sm:$0x1]
    %v256 = vlaneseq
    %v257 = vshrl.u32 %v256, 7
    %v258 = vsub.s32 0, %v257
    %v259 = vrot.slane %v254, %v258
    %v277 = vunpack.c.l.b16 %v237
    %v278 = vunpack.c.l.b16 %v238
    %v279 = vunpack.c.l.b16 %v239
    %v280 = vunpack.c.l.b16 %v240
    %v281 = vunpack.c.l.b16 %v241
    %v282 = vunpack.c.l.b16 %v242
    %v283 = vunpack.c.l.b16 %v243
    %v284 = vunpack.c.l.b16 %v244
    %v285 = vunpack.c.l.b16 %v245
    %v286 = vunpack.c.l.b16 %v246
    %v287 = vunpack.c.l.b16 %v247
    %v288 = vunpack.c.l.b16 %v248
    %v289 = vunpack.c.l.b16 %v249
    %v290 = vunpack.c.l.b16 %v250
    %v291 = vunpack.c.l.b16 %v251
    %v292 = vunpack.c.l.b16 %v252
    %v293 = vpack.c.b16 %v278, %v277
    %v294 = vpack.c.b16 %v280, %v279
    %v295 = vpack.c.b16 %v282, %v281
    %v296 = vpack.c.b16 %v284, %v283
    %v297 = vpack.c.b16 %v286, %v285
    %v298 = vpack.c.b16 %v288, %v287
    %v299 = vpack.c.b16 %v290, %v289
    %v300 = vpack.c.b16 %v292, %v291
    %309 = vmatprep.subr.bf16.mxu0 0
    %310 = vmatpush1.bf16.msra.mxu0 %v293
    %311 = vmatprep.subr.bf16.mxu0 0
    %312 = vmatpush1.bf16.msra.mxu0 %v294
    %313 = vmatprep.subr.bf16.mxu0 0
    %314 = vmatpush1.bf16.msra.mxu0 %v295
    %315 = vmatprep.subr.bf16.mxu0 0
    %316 = vmatpush1.bf16.msra.mxu0 %v296
    %317 = vmatprep.subr.bf16.mxu0 0
    %318 = vmatpush1.bf16.msra.mxu0 %v297
    %319 = vmatprep.subr.bf16.mxu0 0
    %320 = vmatpush1.bf16.msra.mxu0 %v298
    %321 = vmatprep.subr.bf16.mxu0 0
    %322 = vmatpush1.bf16.msra.mxu0 %v299
    %323 = vmatprep.subr.bf16.mxu0 0
    %324 = vmatpush1.bf16.msra.mxu0 %v300
    %325 = vmatprep.subr.bf16.mxu0 0
    %326 = vmatpush1.bf16.msra.mxu0 0
    %327 = vmatprep.subr.bf16.mxu0 0
    %328 = vmatpush1.bf16.msra.mxu0 0
    %329 = vmatprep.subr.bf16.mxu0 0
    %330 = vmatpush1.bf16.msra.mxu0 0
    %331 = vmatprep.subr.bf16.mxu0 0
    %332 = vmatpush1.bf16.msra.mxu0 0
    %333 = vmatprep.subr.bf16.mxu0 0
    %334 = vmatpush1.bf16.msra.mxu0 0
    %335 = vmatprep.subr.bf16.mxu0 0
    %336 = vmatpush1.bf16.msra.mxu0 0
    %337 = vmatprep.subr.bf16.mxu0 0
    %338 = vmatpush1.bf16.msra.mxu0 0
    %339 = vmatprep.subr.bf16.mxu0 0
    %340 = vmatpush1.bf16.msra.mxu0 0
    %341 = vmatprep.mubr.bf16.mxu0 0
    %342 = vmatmul.mubr.bf16.gmra.mrb[0].mxu0 %v235
    %v343 = vpop.f32.mrb[0].mxu0
    %v344 = vadd.f32 %v259, %v343
    %v345 = vpop.f32.mrb[0].mxu0
    %v346 = vpop.f32.mrb[0].mxu0
    %v347 = vpop.f32.mrb[0].mxu0
    %348 = vdwg.mxu0
    %s349 = scalar_lea.vmem [#allocation5], 192
    %v350 = vld [vmem:[%s349] sm:$0xf]
    %v351 = vld [vmem:[%s349 + $0x4] sm:$0xf]
    %v352 = vld [vmem:[%s349 + $0x8] sm:$0xf]
    %v353 = vld [vmem:[%s349 + $0xc] sm:$0xf]
    %v354 = vld [vmem:[%s349 + $0x10] sm:$0xf]
    %v355 = vld [vmem:[%s349 + $0x14] sm:$0xf]
    %v356 = vld [vmem:[%s349 + $0x18] sm:$0xf]
    %v357 = vld [vmem:[%s349 + $0x1c] sm:$0xf]
    %v358 = vld [vmem:[%s349 + $0x20] sm:$0xf]
    %v359 = vld [vmem:[%s349 + $0x24] sm:$0xf]
    %v360 = vld [vmem:[%s349 + $0x28] sm:$0xf]
    %v361 = vld [vmem:[%s349 + $0x2c] sm:$0xf]
    %v362 = vld [vmem:[%s349 + $0x30] sm:$0xf]
    %v363 = vld [vmem:[%s349 + $0x34] sm:$0xf]
    %v364 = vld [vmem:[%s349 + $0x38] sm:$0xf]
    %v365 = vld [vmem:[%s349 + $0x3c] sm:$0xf]
    %s366 = scalar_lea.vmem [#allocation7], 3
    %v367 = vld [vmem:[%s366] sm:$0x1]
    %v369 = vlaneseq
    %v370 = vshrl.u32 %v369, 7
    %v371 = vsub.s32 0, %v370
    %v372 = vrot.slane %v367, %v371
    %v390 = vunpack.c.l.b16 %v350
    %v391 = vunpack.c.l.b16 %v351
    %v392 = vunpack.c.l.b16 %v352
    %v393 = vunpack.c.l.b16 %v353
    %v394 = vunpack.c.l.b16 %v354
    %v395 = vunpack.c.l.b16 %v355
    %v396 = vunpack.c.l.b16 %v356
    %v397 = vunpack.c.l.b16 %v357
    %v398 = vunpack.c.l.b16 %v358
    %v399 = vunpack.c.l.b16 %v359
    %v400 = vunpack.c.l.b16 %v360
    %v401 = vunpack.c.l.b16 %v361
    %v402 = vunpack.c.l.b16 %v362
    %v403 = vunpack.c.l.b16 %v363
    %v404 = vunpack.c.l.b16 %v364
    %v405 = vunpack.c.l.b16 %v365
    %v406 = vpack.c.b16 %v391, %v390
    %v407 = vpack.c.b16 %v393, %v392
    %v408 = vpack.c.b16 %v395, %v394
    %v409 = vpack.c.b16 %v397, %v396
    %v410 = vpack.c.b16 %v399, %v398
    %v411 = vpack.c.b16 %v401, %v400
    %v412 = vpack.c.b16 %v403, %v402
    %v413 = vpack.c.b16 %v405, %v404
    %422 = vmatprep.subr.bf16.mxu0 0
    %423 = vmatpush1.bf16.msra.mxu0 %v406
    %424 = vmatprep.subr.bf16.mxu0 0
    %425 = vmatpush1.bf16.msra.mxu0 %v407
    %426 = vmatprep.subr.bf16.mxu0 0
    %427 = vmatpush1.bf16.msra.mxu0 %v408
    %428 = vmatprep.subr.bf16.mxu0 0
    %429 = vmatpush1.bf16.msra.mxu0 %v409
    %430 = vmatprep.subr.bf16.mxu0 0
    %431 = vmatpush1.bf16.msra.mxu0 %v410
    %432 = vmatprep.subr.bf16.mxu0 0
    %433 = vmatpush1.bf16.msra.mxu0 %v411
    %434 = vmatprep.subr.bf16.mxu0 0
    %435 = vmatpush1.bf16.msra.mxu0 %v412
    %436 = vmatprep.subr.bf16.mxu0 0
    %437 = vmatpush1.bf16.msra.mxu0 %v413
    %438 = vmatprep.subr.bf16.mxu0 0
    %439 = vmatpush1.bf16.msra.mxu0 0
    %440 = vmatprep.subr.bf16.mxu0 0
    %441 = vmatpush1.bf16.msra.mxu0 0
    %442 = vmatprep.subr.bf16.mxu0 0
    %443 = vmatpush1.bf16.msra.mxu0 0
    %444 = vmatprep.subr.bf16.mxu0 0
    %445 = vmatpush1.bf16.msra.mxu0 0
    %446 = vmatprep.subr.bf16.mxu0 0
    %447 = vmatpush1.bf16.msra.mxu0 0
    %448 = vmatprep.subr.bf16.mxu0 0
    %449 = vmatpush1.bf16.msra.mxu0 0
    %450 = vmatprep.subr.bf16.mxu0 0
    %451 = vmatpush1.bf16.msra.mxu0 0
    %452 = vmatprep.subr.bf16.mxu0 0
    %453 = vmatpush1.bf16.msra.mxu0 0
    %454 = vmatprep.mubr.bf16.mxu0 0
    %455 = vmatmul.mubr.bf16.gmra.mrb[0].mxu0 %v235
    %v456 = vpop.f32.mrb[0].mxu0
    %v457 = vadd.f32 %v372, %v456
    %v458 = vpop.f32.mrb[0].mxu0
    %v459 = vpop.f32.mrb[0].mxu0
    %v460 = vpop.f32.mrb[0].mxu0
    %461 = vdwg.mxu0
    %v462 = vtanh.pop %v344
    %v463 = vmul.f32 %v457, 22.0
    %v464 = vadd.f32 %v463, -20.0
    %v465 = vmul.f32 %v464, 1.442695
    %v466 = vpow.pop %v465
    %v467 = vld [vmem:[%s3] sm:$0xff]
    %v468 = vmul.f32 %v466, %v467
    %v469 = vadd.f32 %v462, %v468
    %v470 = vsub.f32 %v469, %v462
    %v471 = vrcp.pop %v466
    %v472 = vmul.f32 %v470, %v471
    %v473 = vmul.f32 %v472, %v472
    %v474 = vmul.f32 %v473, -0.5
    %v475 = vsub.f32 %v474, %v464
    %v476 = vlaneseq
    %v477 = vand.u32 %v476, 127
    %vm478 = vcmp.lt.s32.totalorder %v477, 4
    %v479 = vsel %vm478, %v475, 0.0
    %480 = vadd.xlane.f32.xlu0 %v479
    %v481 = vpop.xlane.xlu0 %480
    %v482 = vsub.f32 %v481, 3.675754
    %vm483 = vcmp.eq.s32.totalorder %v477, 4
    %v484 = vsel %vm483, %v482, 0.0
    %v485 = vsel %vm478, %v469, %v484
    %486 = vst [vmem:[#allocation8] sm:$0xff] %v485
    // Predicated region
    $region30: #{tpu_custom_call.1} parent=1 // pred_check
      _
    $region31: #{tpu_custom_call.1} parent=1 // pred_check_branch
      %488 = sbr.rel (0) target = $region33
    $region32: #{tpu_custom_call.1} parent=1 // pred_region
      %s490 = ssub.s32 128, 128
      %491 = vsyncadd [#allocation4], %s490
      %s493 = sshll.u32 [#allocation8], 4
      %s494 = int_to_ptr.vmem [resolvable:$true] %s493
      %496 = dma.vmem_to_hbm [thread:$0]  %s494, 128, %s4, [#allocation4]
    $region33: #{tpu_custom_call.1} parent=1 // pred_fallthru
      _
    // Predicated region
    $region34: #{tpu_custom_call.1} parent=1 // pred_check
      _
    $region35: #{tpu_custom_call.1} parent=1 // pred_check_branch
      %498 = sbr.rel (0) target = $region37
    $region36: #{tpu_custom_call.1} parent=1 // pred_region
      %499 = dma.done [#allocation4], 128
    $region37: #{tpu_custom_call.1} parent=1 // pred_fallthru
      _
    %500 = vsyncpa [#allocation3], 1
    %501 = vsyncpa [#allocation6], 1
    %502 = vsyncpa [#allocation4], 1

</llo_original>
